<compile_context>
chip_gen: v6e
topology: v6e:2x2x1
jax: 0.10.0
libtpu: 0.0.40
codegen_flags: <defaults>
</compile_context>

<pallas_src>
import numpy as np
import jax
import jax.numpy as jnp
from jax.experimental import pallas as pl
from jax.experimental.pallas import tpu as pltpu


# ----------------------------------------------------------------------------
# Kernel (single body, used for both the no-grid and the batch-grid paths)
# ----------------------------------------------------------------------------

def _sigmoid(x):
    # Exact sigmoid (matches torch.sigmoid); exp runs on the EUP slot anyway.
    return 1.0 / (1.0 + jnp.exp(-x))


def _pine_kernel(x_ref, seg_ref, wg_ref, v_ref, wh_ref, cw_ref, cb_ref, o_ref):
    # x_ref : (rows, S*Din)  packed set inputs, rows = block_B * N
    # seg   : (block_B, rows) block-of-ones segment-sum matrix (sum over set dim)
    # wg    : (S*Din, S*K)   block-diagonal gate weight
    # v     : (1, S*K)       concatenated gate biases
    # wh    : (S*K, H)       W_h^T
    # cw    : (H, out)       C.weight^T
    # cb    : (1, out)       C.bias
    g = _sigmoid(jnp.dot(x_ref[...], wg_ref[...],
                         preferred_element_type=jnp.float32) + v_ref[...])
    # segment-sum over set elements via MXU (avoids 3-D reshape + VALU reduce)
    z = jnp.dot(seg_ref[...], g, preferred_element_type=jnp.float32)      # (bB, S*K)
    h = _sigmoid(jnp.dot(z, wh_ref[...], preferred_element_type=jnp.float32))
    out = jnp.dot(h, cw_ref[...], preferred_element_type=jnp.float32) + cb_ref[...]
    o_ref[...] = out.astype(o_ref.dtype)


# ----------------------------------------------------------------------------
# Wrapper
# ----------------------------------------------------------------------------

def _choose_block_b(B, N, n_cols_f32):
    """Pick a batch-row block (multiple of 8, dividing B, >= 2 grid steps) whose
    per-step working set stays far below the scoped-VMEM budget (safe even on
    v7x's 64 MiB physical / 32 MiB default).  Returns None -> no-grid path."""
    best = None
    for b in range(8, B // 2 + 1, 8):
        if B % b != 0:
            continue
        rows = b * N
        approx_bytes = rows * n_cols_f32 * 4 * 3       # x block (x2 buffers) + g
        if approx_bytes > 8 * 1024 * 1024:
            break
        best = b
    return best


def _build_seg_matrix(block_b, set_size):
    """(block_b, block_b*set_size) block-of-ones matrix: row p sums set elements
    of local batch row p."""
    r = np.arange(block_b * set_size) // set_size
    b = np.arange(block_b)
    return jnp.asarray((r[None, :] == b[:, None]).astype(np.float32))


def pine_forward_pallas(Xs, params):
    n_sets = len(Xs)
    B, N, Din = Xs[0].shape
    # TODO(synk): unequal set sizes would need per-set row blocks or padding+masking.
    assert all(int(x.shape[1]) == N for x in Xs), "fused path assumes equal set sizes"
    n_proj, proj_size, _ = params['U_0'].shape
    K = n_proj * proj_size
    H = params['W_h'].shape[0]
    out_size = params['C_w'].shape[0]
    SDin, SK = n_sets * Din, n_sets * K

    # ---- parameter-only preprocessing (fused by XLA inside the same jit) ----
    wg_blocks = []
    for i in range(n_sets):
        Wg_i = jnp.matmul(params[f'U_{i}'], params[f'A_{i}']).reshape(K, Din)
        wg_blocks.append(Wg_i.T)                               # (Din, K)
    W_gate = jax.scipy.linalg.block_diag(*wg_blocks)           # (S*Din, S*K)
    V_all = jnp.concatenate([params[f'V_{i}'] for i in range(n_sets)]).reshape(1, SK)
    WhT = params['W_h'].T                                      # (S*K, H)
    CwT = params['C_w'].T                                      # (H, out)
    Cb = params['C_b'].reshape(1, out_size)                    # (1, out)

    # ---- activation packing: lane-pack all sets into one (B*N, S*Din) slab ----
    x_packed = jnp.concatenate(Xs, axis=-1).reshape(B * N, SDin)

    block_B = _choose_block_b(B, N, SDin + SK)

    if block_B is None:
        # Small batch: single invocation, everything resident in VMEM, no grid
        # -> no dead double-buffering of a single-step pipeline.
        seg = _build_seg_matrix(B, N)                          # (B, B*N)
        vm = pltpu.MemorySpace.VMEM
        return pl.pallas_call(
            _pine_kernel,
            out_shape=jax.ShapeDtypeStruct((B, out_size), jnp.float32),
            in_specs=[pl.BlockSpec(memory_space=vm)] * 7,
            out_specs=pl.BlockSpec(memory_space=vm),
        )(x_packed, seg, W_gate, V_all, WhT, CwT, Cb)

    # Larger batch: parallel batch-row grid (sharded across TensorCores on v7x).
    seg = _build_seg_matrix(block_B, N)                        # (block_B, block_B*N)
    grid = (B // block_B,)
    return pl.pallas_call(
        _pine_kernel,
        out_shape=jax.ShapeDtypeStruct((B, out_size), jnp.float32),
        grid=grid,
        in_specs=[
            pl.BlockSpec((block_B * N, SDin), lambda i: (i, 0)),   # x rows per block
            pl.BlockSpec(seg.shape, lambda i: (0, 0)),             # weights: resident
            pl.BlockSpec(W_gate.shape, lambda i: (0, 0)),
            pl.BlockSpec(V_all.shape, lambda i: (0, 0)),
            pl.BlockSpec(WhT.shape, lambda i: (0, 0)),
            pl.BlockSpec(CwT.shape, lambda i: (0, 0)),
            pl.BlockSpec(Cb.shape, lambda i: (0, 0)),
        ],
        out_specs=pl.BlockSpec((block_B, out_size), lambda i: (i, 0)),
        compiler_params=pltpu.CompilerParams(
            dimension_semantics=("parallel",)),
    )(x_packed, seg, W_gate, V_all, WhT, CwT, Cb)


# ----------------------------------------------------------------------------
# Deterministic parameter construction (shapes match the PyTorch module)
# ----------------------------------------------------------------------------

def init_params(key, input_size, proj_size, n_proj, n_sets, hidden_size, output_size):
    params = {}
    keys = jax.random.split(key, 3 * n_sets + 3)
    idx = 0
    for i in range(n_sets):
        params[f'U_{i}'] = jax.random.uniform(
            keys[idx], (n_proj, proj_size, 1), jnp.float32, -1.0, 1.0); idx += 1
        ba = 1.0 / np.sqrt(input_size)
        params[f'A_{i}'] = jax.random.uniform(
            keys[idx], (n_proj, 1, input_size), jnp.float32, -ba, ba); idx += 1
        params[f'V_{i}'] = jax.random.uniform(
            keys[idx], (n_proj * proj_size,), jnp.float32, -ba, ba); idx += 1
    bh = 1.0 / np.sqrt(n_sets * n_proj * proj_size)
    params['W_h'] = jax.random.uniform(
        keys[idx], (hidden_size, n_sets * n_proj * proj_size), jnp.float32, -bh, bh); idx += 1
    bc = 1.0 / np.sqrt(hidden_size)
    params['C_w'] = jax.random.uniform(
        keys[idx], (output_size, hidden_size), jnp.float32, -bc, bc); idx += 1
    params['C_b'] = jax.random.uniform(
        keys[idx], (output_size,), jnp.float32, -bc, bc); idx += 1
    return params


# ----------------------------------------------------------------------------
# Pure-JAX reference (PyTorch semantics)
# ----------------------------------------------------------------------------

def pine_forward_ref(Xs, params):
    z = []
    for i, X in enumerate(Xs):
        Din = X.shape[-1]
        Wg = jnp.matmul(params[f'U_{i}'], params[f'A_{i}']).reshape(-1, Din)
        g = jax.nn.sigmoid(
            jnp.einsum('bnd,kd->bnk', X, Wg, precision='highest') + params[f'V_{i}'])
        z.append(g.sum(axis=1))
    zs = jnp.concatenate(z, axis=-1)
    h = jax.nn.sigmoid(jnp.matmul(zs, params['W_h'].T, precision='highest'))
    return jnp.matmul(h, params['C_w'].T, precision='highest') + params['C_b']


# ----------------------------------------------------------------------------
# Main
# ----------------------------------------------------------------------------

if __name__ == "__main__":
    input_size, proj_size, n_proj, n_sets = 4, 8, 4, 2
    hidden_size, output_size = 32, 1
    N = 16

    key = jax.random.PRNGKey(0)
    kp, kx = jax.random.split(key)
    params = init_params(kp, input_size, proj_size, n_proj, n_sets,
                         hidden_size, output_size)
    kx0, kx1, ky0, ky1 = jax.random.split(kx, 4)

    fwd = jax.jit(lambda a, b, p: pine_forward_pallas([a, b], p))

    # Small case: no-grid, fully-VMEM-resident single invocation.
    B0 = 2
    X0 = jax.random.normal(kx0, (B0, N, input_size), jnp.float32)
    X1 = jax.random.normal(kx1, (B0, N, input_size), jnp.float32)
    out_small = jax.block_until_ready(fwd(X0, X1, params))
    ref_small = jax.block_until_ready(pine_forward_ref([X0, X1], params))
    np.testing.assert_allclose(np.asarray(out_small), np.asarray(ref_small),
                               rtol=5e-3, atol=5e-3)
    assert out_small.shape == (B0, output_size)

    # Larger batch: exercises the parallel batch-row grid path (v7x megacore).
    B1 = 32
    Y0 = jax.random.normal(ky0, (B1, N, input_size), jnp.float32)
    Y1 = jax.random.normal(ky1, (B1, N, input_size), jnp.float32)
    out_big = jax.block_until_ready(fwd(Y0, Y1, params))
    ref_big = jax.block_until_ready(pine_forward_ref([Y0, Y1], params))
    np.testing.assert_allclose(np.asarray(out_big), np.asarray(ref_big),
                               rtol=5e-3, atol=5e-3)
    assert out_big.shape == (B1, output_size)

    print("KERNEL_OK")
</pallas_src>

<mosaic_0001>
module attributes {stable_mosaic.version = 11 : i64} {
  func.func @_pine_kernel(%arg0: memref<32x8xf32, #tpu.memory_space<vmem>>, %arg1: memref<2x32xf32, #tpu.memory_space<vmem>>, %arg2: memref<8x64xf32, #tpu.memory_space<vmem>>, %arg3: memref<1x64xf32, #tpu.memory_space<vmem>>, %arg4: memref<64x32xf32, #tpu.memory_space<vmem>>, %arg5: memref<32x1xf32, #tpu.memory_space<vmem>>, %arg6: memref<1x1xf32, #tpu.memory_space<vmem>>, %arg7: memref<2x1xf32, #tpu.memory_space<vmem>>) attributes {dimension_semantics = [], scalar_prefetch = 0 : i64, scratch_operands = 0 : i64, tpu.core_type = #tpu.core_type<tc>} {
    %c0 = arith.constant 0 : index
    %c0_0 = arith.constant 0 : index
    %0 = vector.load %arg0[%c0, %c0_0] : memref<32x8xf32, #tpu.memory_space<vmem>>, vector<32x8xf32>
    %c0_1 = arith.constant 0 : index
    %c0_2 = arith.constant 0 : index
    %1 = vector.load %arg2[%c0_1, %c0_2] : memref<8x64xf32, #tpu.memory_space<vmem>>, vector<8x64xf32>
    %cst = arith.constant dense<0.000000e+00> : vector<32x64xf32>
    %2 = tpu.matmul %0, %1, %cst {dimension_numbers = #tpu.dot_dimension_numbers<[1], [0], [0], [1], [0, 0, 1, 1], [], []>} : vector<32x8xf32>, vector<8x64xf32>, vector<32x64xf32> -> vector<32x64xf32>
    %c0_3 = arith.constant 0 : index
    %c0_4 = arith.constant 0 : index
    %3 = vector.load %arg3[%c0_3, %c0_4] : memref<1x64xf32, #tpu.memory_space<vmem>>, vector<1x64xf32>
    %4 = vector.broadcast %3 : vector<1x64xf32> to vector<32x64xf32>
    %5 = arith.addf %2, %4 : vector<32x64xf32>
    %cst_5 = arith.constant 0.000000e+00 : f32
    %6 = vector.broadcast %cst_5 : f32 to vector<32x64xf32>
    %7 = arith.subf %6, %5 : vector<32x64xf32>
    %8 = math.exp %7 : vector<32x64xf32>
    %cst_6 = arith.constant 1.000000e+00 : f32
    %9 = vector.broadcast %cst_6 : f32 to vector<32x64xf32>
    %10 = arith.addf %9, %8 : vector<32x64xf32>
    %cst_7 = arith.constant 1.000000e+00 : f32
    %11 = vector.broadcast %cst_7 : f32 to vector<32x64xf32>
    %12 = arith.divf %11, %10 : vector<32x64xf32>
    %c0_8 = arith.constant 0 : index
    %c0_9 = arith.constant 0 : index
    %13 = vector.load %arg1[%c0_8, %c0_9] : memref<2x32xf32, #tpu.memory_space<vmem>>, vector<2x32xf32>
    %cst_10 = arith.constant dense<0.000000e+00> : vector<2x64xf32>
    %14 = tpu.matmul %13, %12, %cst_10 {dimension_numbers = #tpu.dot_dimension_numbers<[1], [0], [0], [1], [0, 0, 1, 1], [], []>} : vector<2x32xf32>, vector<32x64xf32>, vector<2x64xf32> -> vector<2x64xf32>
    %c0_11 = arith.constant 0 : index
    %c0_12 = arith.constant 0 : index
    %15 = vector.load %arg4[%c0_11, %c0_12] : memref<64x32xf32, #tpu.memory_space<vmem>>, vector<64x32xf32>
    %cst_13 = arith.constant dense<0.000000e+00> : vector<2x32xf32>
    %16 = tpu.matmul %14, %15, %cst_13 {dimension_numbers = #tpu.dot_dimension_numbers<[1], [0], [0], [1], [0, 0, 1, 1], [], []>} : vector<2x64xf32>, vector<64x32xf32>, vector<2x32xf32> -> vector<2x32xf32>
    %cst_14 = arith.constant 0.000000e+00 : f32
    %17 = vector.broadcast %cst_14 : f32 to vector<2x32xf32>
    %18 = arith.subf %17, %16 : vector<2x32xf32>
    %19 = math.exp %18 : vector<2x32xf32>
    %cst_15 = arith.constant 1.000000e+00 : f32
    %20 = vector.broadcast %cst_15 : f32 to vector<2x32xf32>
    %21 = arith.addf %20, %19 : vector<2x32xf32>
    %cst_16 = arith.constant 1.000000e+00 : f32
    %22 = vector.broadcast %cst_16 : f32 to vector<2x32xf32>
    %23 = arith.divf %22, %21 : vector<2x32xf32>
    %c0_17 = arith.constant 0 : index
    %c0_18 = arith.constant 0 : index
    %24 = vector.load %arg5[%c0_17, %c0_18] : memref<32x1xf32, #tpu.memory_space<vmem>>, vector<32x1xf32>
    %cst_19 = arith.constant dense<0.000000e+00> : vector<2x1xf32>
    %25 = tpu.matmul %23, %24, %cst_19 {dimension_numbers = #tpu.dot_dimension_numbers<[1], [0], [0], [1], [0, 0, 1, 1], [], []>} : vector<2x32xf32>, vector<32x1xf32>, vector<2x1xf32> -> vector<2x1xf32>
    %c0_20 = arith.constant 0 : index
    %c0_21 = arith.constant 0 : index
    %26 = vector.load %arg6[%c0_20, %c0_21] : memref<1x1xf32, #tpu.memory_space<vmem>>, vector<1x1xf32>
    %27 = vector.broadcast %26 : vector<1x1xf32> to vector<2x1xf32>
    %28 = arith.addf %25, %27 : vector<2x1xf32>
    %c0_22 = arith.constant 0 : index
    %c0_23 = arith.constant 0 : index
    %29 = vector.load %arg7[%c0_22, %c0_23] : memref<2x1xf32, #tpu.memory_space<vmem>>, vector<2x1xf32>
    tpu.vector_store %arg7[%c0_22, %c0_23], %28 {strides = array<i32>} : memref<2x1xf32, #tpu.memory_space<vmem>>, vector<2x1xf32>,
    return
  }
}

</mosaic_0001>

<llo_original>
// kernel: _lambda_.1
$region0: #{_lambda_.1}
  #allocation0 [shape = 'u32[]', space=smem, size = 0x4, offset = 0x4, fixed_abs, tag = 'smem constant byte address 0x4 - core index']
  #allocation1 [shape = 'u32[144,128]{1,0:T(1,128)}', space=vmem, size = 0x12000, scoped, tag = 'internal scratch']
  #allocation2 [shape = 'f32[1,1]{1,0:T(1,128)S(1)}', space=vmem, size = 0x200, scoped, tag = 'scoped memory for _lambda_.1']
  %s0 = inlined_call_operand.vmem [shape: f32[32,8], index: 0, kind: input, shape index: {}]
  %s1 = inlined_call_operand.vmem [shape: f32[2,32], index: 1, kind: input, shape index: {}]
  %s2 = inlined_call_operand.vmem [shape: f32[8,64], index: 2, kind: input, shape index: {}]
  %s3 = inlined_call_operand.vmem [shape: f32[1,64], index: 3, kind: input, shape index: {}]
  %s4 = inlined_call_operand.vmem [shape: f32[64,32], index: 4, kind: input, shape index: {}]
  %s5 = inlined_call_operand.vmem [shape: f32[32,1], index: 5, kind: input, shape index: {}]
  %s6 = inlined_call_operand.<no memory space> [shape: f32[1,1], index: 6, kind: input, shape index: {}]
  %s7 = inlined_call_operand.vmem [shape: f32[2,1], index: 7, kind: output, shape index: {}]
  %s8 = sld [smem:[#allocation0]]
  $region38: #{_lambda_.1} parent=0
    _
  %s10 = ssub.s32 1, %s8
  %s11 = scalar_select 0, %s10, %s8
  %v12 = vstv %s6
  %13 = vst [vmem:[#allocation2] sm:$0x1] %v12
  // Predicated region
  $region2: #{_lambda_.1} parent=0 // pred_check
    _
  $region3: #{_lambda_.1} parent=0 // pred_check_branch
    %15 = sbr.rel (0) target = $region5
  $region4: #{_lambda_.1} parent=0 // pred_region
    _
  $region5: #{_lambda_.1} parent=0 // pred_fallthru
    _
  // Predicated region
  $region6: #{_lambda_.1} parent=0 // pred_check
    _
  $region7: #{_lambda_.1} parent=0 // pred_check_branch
    %17 = sbr.rel (0) target = $region9
  $region8: #{_lambda_.1} parent=0 // pred_region
    _
  $region9: #{_lambda_.1} parent=0 // pred_fallthru
    _
  // Predicated region
  $region10: #{_lambda_.1} parent=0 // pred_check
    _
  $region11: #{_lambda_.1} parent=0 // pred_check_branch
    %19 = sbr.rel (0) target = $region13
  $region12: #{_lambda_.1} parent=0 // pred_region
    _
  $region13: #{_lambda_.1} parent=0 // pred_fallthru
    _
  // Predicated region
  $region14: #{_lambda_.1} parent=0 // pred_check
    _
  $region15: #{_lambda_.1} parent=0 // pred_check_branch
    %21 = sbr.rel (0) target = $region17
  $region16: #{_lambda_.1} parent=0 // pred_region
    _
  $region17: #{_lambda_.1} parent=0 // pred_fallthru
    _
  // Predicated region
  $region18: #{_lambda_.1} parent=0 // pred_check
    _
  $region19: #{_lambda_.1} parent=0 // pred_check_branch
    %23 = sbr.rel (0) target = $region21
  $region20: #{_lambda_.1} parent=0 // pred_region
    _
  $region21: #{_lambda_.1} parent=0 // pred_fallthru
    _
  // Predicated region
  $region22: #{_lambda_.1} parent=0 // pred_check
    _
  $region23: #{_lambda_.1} parent=0 // pred_check_branch
    %25 = sbr.rel (0) target = $region25
  $region24: #{_lambda_.1} parent=0 // pred_region
    _
  $region25: #{_lambda_.1} parent=0 // pred_fallthru
    _
  // Predicated region
  $region26: #{_lambda_.1} parent=0 // pred_check
    _
  $region27: #{_lambda_.1} parent=0 // pred_check_branch
    %27 = sbr.rel (0) target = $region29
  $region28: #{_lambda_.1} parent=0 // pred_region
    _
  $region29: #{_lambda_.1} parent=0 // pred_fallthru
    _
  %v28 = vld [vmem:[%s0] sm:$0xff]
  %v29 = vld [vmem:[%s0 + $0x8] sm:$0xff]
  %v30 = vld [vmem:[%s0 + $0x10] sm:$0xff]
  %v31 = vld [vmem:[%s0 + $0x18] sm:$0xff]
  %v32 = vld [vmem:[%s2] sm:$0xff]
  %v33 = vld [vmem:[%s3] sm:$0x1]
  %v35 = vlaneseq
  %v36 = vshrl.u32 %v35, 7
  %v37 = vsub.s32 0, %v36
  %v38 = vrot.slane %v33, %v37
  %vm40 = vcmask 64512
  %v42 = vsel %vm40, %v28, 0
  %v45 = vsel %vm40, %v29, 0
  %v48 = vsel %vm40, %v30, 0
  %v51 = vsel %vm40, %v31, 0
  %53 = vmatprep.subr.mxu0 0.0
  %54 = vmatpush1.msra.mxu0 0.0
  %55 = vmatprep.subr.mxu0 0.0
  %56 = vmatpush1.msra.mxu0 0.0
  %57 = vmatprep.subr.mxu0 0.0
  %58 = vmatpush1.msra.mxu0 0.0
  %59 = vmatprep.subr.mxu0 0.0
  %60 = vmatpush1.msra.mxu0 0.0
  %61 = vmatprep.subr.mxu0 0.0
  %62 = vmatpush1.msra.mxu0 0.0
  %63 = vmatprep.subr.mxu0 0.0
  %64 = vmatpush1.msra.mxu0 0.0
  %65 = vmatprep.subr.mxu0 0.0
  %66 = vmatpush1.msra.mxu0 0.0
  %67 = vmatprep.subr.mxu0 0.0
  %68 = vmatpush1.msra.mxu0 0.0
  %69 = vmatprep.subr.mxu0 0.0
  %70 = vmatpush1.msra.mxu0 0.0
  %71 = vmatprep.subr.mxu0 0.0
  %72 = vmatpush1.msra.mxu0 0.0
  %73 = vmatprep.subr.mxu0 0.0
  %74 = vmatpush1.msra.mxu0 0.0
  %75 = vmatprep.subr.mxu0 0.0
  %76 = vmatpush1.msra.mxu0 0.0
  %77 = vmatprep.subr.mxu0 0.0
  %78 = vmatpush1.msra.mxu0 0.0
  %79 = vmatprep.subr.mxu0 0.0
  %80 = vmatpush1.msra.mxu0 0.0
  %81 = vmatprep.subr.mxu0 0.0
  %82 = vmatpush1.msra.mxu0 0.0
  %83 = vmatprep.subr.mxu0 0.0
  %84 = vmatpush1.msra.mxu0 %v32
  %85 = vmatprep.subr.mxu0 0.0
  %86 = vmatpush2.msra.mxu0 0.0
  %87 = vmatprep.subr.mxu0 0.0
  %88 = vmatpush2.msra.mxu0 0.0
  %89 = vmatprep.subr.mxu0 0.0
  %90 = vmatpush2.msra.mxu0 0.0
  %91 = vmatprep.subr.mxu0 0.0
  %92 = vmatpush2.msra.mxu0 0.0
  %93 = vmatprep.subr.mxu0 0.0
  %94 = vmatpush2.msra.mxu0 0.0
  %95 = vmatprep.subr.mxu0 0.0
  %96 = vmatpush2.msra.mxu0 0.0
  %97 = vmatprep.subr.mxu0 0.0
  %98 = vmatpush2.msra.mxu0 0.0
  %99 = vmatprep.subr.mxu0 0.0
  %100 = vmatpush2.msra.mxu0 0.0
  %101 = vmatprep.subr.mxu0 0.0
  %102 = vmatpush2.msra.mxu0 0.0
  %103 = vmatprep.subr.mxu0 0.0
  %104 = vmatpush2.msra.mxu0 0.0
  %105 = vmatprep.subr.mxu0 0.0
  %106 = vmatpush2.msra.mxu0 0.0
  %107 = vmatprep.subr.mxu0 0.0
  %108 = vmatpush2.msra.mxu0 0.0
  %109 = vmatprep.subr.mxu0 0.0
  %110 = vmatpush2.msra.mxu0 0.0
  %111 = vmatprep.subr.mxu0 0.0
  %112 = vmatpush2.msra.mxu0 0.0
  %113 = vmatprep.subr.mxu0 0.0
  %114 = vmatpush2.msra.mxu0 0.0
  %115 = vmatprep.subr.mxu0 0.0
  %116 = vmatpush2.msra.mxu0 0.0
  %117 = vmatprep.mubr.f32.mxu0 0.0
  %118 = vmatmul.mubr.f32.gmra.mxu0 %v42
  %v119 = vpop.f32.mrf.mxu0
  %v120 = vadd.f32 %v38, %v119
  %v121 = vpop.f32.mrf.mxu0
  %122 = vmatprep.mubr.f32.mxu0 0.0
  %123 = vmatmul.mubr.f32.gmra.mxu0 %v45
  %v124 = vpop.f32.mrf.mxu0
  %v125 = vadd.f32 %v38, %v124
  %v126 = vpop.f32.mrf.mxu0
  %127 = vmatprep.mubr.f32.mxu0 0.0
  %128 = vmatmul.mubr.f32.gmra.mxu0 %v48
  %v129 = vpop.f32.mrf.mxu0
  %v130 = vadd.f32 %v38, %v129
  %v131 = vpop.f32.mrf.mxu0
  %132 = vmatprep.mubr.f32.mxu0 0.0
  %133 = vmatmul.mubr.f32.gmra.mxu0 %v51
  %v134 = vpop.f32.mrf.mxu0
  %v135 = vadd.f32 %v38, %v134
  %v136 = vpop.f32.mrf.mxu0
  %137 = vdwg.mxu0
  %v138 = vsub.f32 0.0, %v120
  %v139 = vsub.f32 0.0, %v125
  %v140 = vsub.f32 0.0, %v130
  %v141 = vsub.f32 0.0, %v135
  %v142 = vmul.f32 %v138, 1.442695
  %v143 = vpow.pop %v142
  %v144 = vmul.f32 %v139, 1.442695
  %v145 = vpow.pop %v144
  %v146 = vmul.f32 %v140, 1.442695
  %v147 = vpow.pop %v146
  %v148 = vmul.f32 %v141, 1.442695
  %v149 = vpow.pop %v148
  %v150 = vadd.f32 %v143, 1.0
  %v151 = vadd.f32 %v145, 1.0
  %v152 = vadd.f32 %v147, 1.0
  %v153 = vadd.f32 %v149, 1.0
  %v154 = vrcp.pop %v150
  %v155 = vmul.f32 1.0, %v154
  %v156 = vrcp.pop %v151
  %v157 = vmul.f32 1.0, %v156
  %v158 = vrcp.pop %v152
  %v159 = vmul.f32 1.0, %v158
  %v160 = vrcp.pop %v153
  %v161 = vmul.f32 1.0, %v160
  %v162 = vld [vmem:[%s1] sm:$0x3]
  %vm163 = vcmask 261120
  %v165 = vsel %vm163, %v162, 0
  %167 = vmatprep.subr.mxu0 0.0
  %168 = vmatpush1.msra.mxu0 0.0
  %169 = vmatprep.subr.mxu0 0.0
  %170 = vmatpush1.msra.mxu0 0.0
  %171 = vmatprep.subr.mxu0 0.0
  %172 = vmatpush1.msra.mxu0 0.0
  %173 = vmatprep.subr.mxu0 0.0
  %174 = vmatpush1.msra.mxu0 0.0
  %175 = vmatprep.subr.mxu0 0.0
  %176 = vmatpush1.msra.mxu0 0.0
  %177 = vmatprep.subr.mxu0 0.0
  %178 = vmatpush1.msra.mxu0 0.0
  %179 = vmatprep.subr.mxu0 0.0
  %180 = vmatpush1.msra.mxu0 0.0
  %181 = vmatprep.subr.mxu0 0.0
  %182 = vmatpush1.msra.mxu0 0.0
  %183 = vmatprep.subr.mxu0 0.0
  %184 = vmatpush1.msra.mxu0 0.0
  %185 = vmatprep.subr.mxu0 0.0
  %186 = vmatpush1.msra.mxu0 0.0
  %187 = vmatprep.subr.mxu0 0.0
  %188 = vmatpush1.msra.mxu0 0.0
  %189 = vmatprep.subr.mxu0 0.0
  %190 = vmatpush1.msra.mxu0 0.0
  %191 = vmatprep.subr.mxu0 0.0
  %192 = vmatpush1.msra.mxu0 %v161
  %193 = vmatprep.subr.mxu0 0.0
  %194 = vmatpush1.msra.mxu0 %v159
  %195 = vmatprep.subr.mxu0 0.0
  %196 = vmatpush1.msra.mxu0 %v157
  %197 = vmatprep.subr.mxu0 0.0
  %198 = vmatpush1.msra.mxu0 %v155
  %199 = vmatprep.subr.mxu0 0.0
  %200 = vmatpush2.msra.mxu0 0.0
  %201 = vmatprep.subr.mxu0 0.0
  %202 = vmatpush2.msra.mxu0 0.0
  %203 = vmatprep.subr.mxu0 0.0
  %204 = vmatpush2.msra.mxu0 0.0
  %205 = vmatprep.subr.mxu0 0.0
  %206 = vmatpush2.msra.mxu0 0.0
  %207 = vmatprep.subr.mxu0 0.0
  %208 = vmatpush2.msra.mxu0 0.0
  %209 = vmatprep.subr.mxu0 0.0
  %210 = vmatpush2.msra.mxu0 0.0
  %211 = vmatprep.subr.mxu0 0.0
  %212 = vmatpush2.msra.mxu0 0.0
  %213 = vmatprep.subr.mxu0 0.0
  %214 = vmatpush2.msra.mxu0 0.0
  %215 = vmatprep.subr.mxu0 0.0
  %216 = vmatpush2.msra.mxu0 0.0
  %217 = vmatprep.subr.mxu0 0.0
  %218 = vmatpush2.msra.mxu0 0.0
  %219 = vmatprep.subr.mxu0 0.0
  %220 = vmatpush2.msra.mxu0 0.0
  %221 = vmatprep.subr.mxu0 0.0
  %222 = vmatpush2.msra.mxu0 0.0
  %223 = vmatprep.subr.mxu0 0.0
  %224 = vmatpush2.msra.mxu0 0.0
  %225 = vmatprep.subr.mxu0 0.0
  %226 = vmatpush2.msra.mxu0 0.0
  %227 = vmatprep.subr.mxu0 0.0
  %228 = vmatpush2.msra.mxu0 0.0
  %229 = vmatprep.subr.mxu0 0.0
  %230 = vmatpush2.msra.mxu0 0.0
  %231 = vmatprep.mubr.f32.mxu0 0.0
  %232 = vmatmul.mubr.f32.gmra.mxu0 %v165
  %v233 = vpop.f32.mrf.mxu0
  %v234 = vadd.f32 0.0, %v233
  %v235 = vpop.f32.mrf.mxu0
  %236 = vdwg.mxu0
  %v237 = vld [vmem:[%s4] sm:$0xff]
  %v238 = vld [vmem:[%s4 + $0x8] sm:$0xff]
  %v239 = vld [vmem:[%s4 + $0x10] sm:$0xff]
  %v240 = vld [vmem:[%s4 + $0x18] sm:$0xff]
  %v241 = vld [vmem:[%s4 + $0x20] sm:$0xff]
  %v242 = vld [vmem:[%s4 + $0x28] sm:$0xff]
  %v243 = vld [vmem:[%s4 + $0x30] sm:$0xff]
  %v244 = vld [vmem:[%s4 + $0x38] sm:$0xff]
  %vm245 = vcmask 523264
  %v247 = vsel %vm245, %v234, 0
  %249 = vmatprep.subr.mxu0 0.0
  %250 = vmatpush1.msra.mxu0 0.0
  %251 = vmatprep.subr.mxu0 0.0
  %252 = vmatpush1.msra.mxu0 0.0
  %253 = vmatprep.subr.mxu0 0.0
  %254 = vmatpush1.msra.mxu0 0.0
  %255 = vmatprep.subr.mxu0 0.0
  %256 = vmatpush1.msra.mxu0 0.0
  %257 = vmatprep.subr.mxu0 0.0
  %258 = vmatpush1.msra.mxu0 0.0
  %259 = vmatprep.subr.mxu0 0.0
  %260 = vmatpush1.msra.mxu0 0.0
  %261 = vmatprep.subr.mxu0 0.0
  %262 = vmatpush1.msra.mxu0 0.0
  %263 = vmatprep.subr.mxu0 0.0
  %264 = vmatpush1.msra.mxu0 0.0
  %265 = vmatprep.subr.mxu0 0.0
  %266 = vmatpush1.msra.mxu0 %v244
  %267 = vmatprep.subr.mxu0 0.0
  %268 = vmatpush1.msra.mxu0 %v243
  %269 = vmatprep.subr.mxu0 0.0
  %270 = vmatpush1.msra.mxu0 %v242
  %271 = vmatprep.subr.mxu0 0.0
  %272 = vmatpush1.msra.mxu0 %v241
  %273 = vmatprep.subr.mxu0 0.0
  %274 = vmatpush1.msra.mxu0 %v240
  %275 = vmatprep.subr.mxu0 0.0
  %276 = vmatpush1.msra.mxu0 %v239
  %277 = vmatprep.subr.mxu0 0.0
  %278 = vmatpush1.msra.mxu0 %v238
  %279 = vmatprep.subr.mxu0 0.0
  %280 = vmatpush1.msra.mxu0 %v237
  %281 = vmatprep.subr.mxu0 0.0
  %282 = vmatpush2.msra.mxu0 0.0
  %283 = vmatprep.subr.mxu0 0.0
  %284 = vmatpush2.msra.mxu0 0.0
  %285 = vmatprep.subr.mxu0 0.0
  %286 = vmatpush2.msra.mxu0 0.0
  %287 = vmatprep.subr.mxu0 0.0
  %288 = vmatpush2.msra.mxu0 0.0
  %289 = vmatprep.subr.mxu0 0.0
  %290 = vmatpush2.msra.mxu0 0.0
  %291 = vmatprep.subr.mxu0 0.0
  %292 = vmatpush2.msra.mxu0 0.0
  %293 = vmatprep.subr.mxu0 0.0
  %294 = vmatpush2.msra.mxu0 0.0
  %295 = vmatprep.subr.mxu0 0.0
  %296 = vmatpush2.msra.mxu0 0.0
  %297 = vmatprep.subr.mxu0 0.0
  %298 = vmatpush2.msra.mxu0 0.0
  %299 = vmatprep.subr.mxu0 0.0
  %300 = vmatpush2.msra.mxu0 0.0
  %301 = vmatprep.subr.mxu0 0.0
  %302 = vmatpush2.msra.mxu0 0.0
  %303 = vmatprep.subr.mxu0 0.0
  %304 = vmatpush2.msra.mxu0 0.0
  %305 = vmatprep.subr.mxu0 0.0
  %306 = vmatpush2.msra.mxu0 0.0
  %307 = vmatprep.subr.mxu0 0.0
  %308 = vmatpush2.msra.mxu0 0.0
  %309 = vmatprep.subr.mxu0 0.0
  %310 = vmatpush2.msra.mxu0 0.0
  %311 = vmatprep.subr.mxu0 0.0
  %312 = vmatpush2.msra.mxu0 0.0
  %313 = vmatprep.mubr.f32.mxu0 0.0
  %314 = vmatmul.mubr.f32.gmra.mxu0 %v247
  %v315 = vpop.f32.mrf.mxu0
  %v316 = vadd.f32 0.0, %v315
  %v317 = vpop.f32.mrf.mxu0
  %318 = vdwg.mxu0
  %v319 = vsub.f32 0.0, %v316
  %v320 = vmul.f32 %v319, 1.442695
  %v321 = vpow.pop %v320
  %v322 = vadd.f32 %v321, 1.0
  %v323 = vrcp.pop %v322
  %v324 = vmul.f32 1.0, %v323
  %v325 = vld [vmem:[%s5] sm:$0xff]
  %v326 = vld [vmem:[%s5 + $0x8] sm:$0xff]
  %v327 = vld [vmem:[%s5 + $0x10] sm:$0xff]
  %v328 = vld [vmem:[%s5 + $0x18] sm:$0xff]
  %v329 = vld [vmem:[#allocation2] sm:$0x1]
  %v331 = vlaneseq
  %v332 = vshrl.u32 %v331, 7
  %v333 = vsub.s32 0, %v332
  %v334 = vrot.slane %v329, %v333
  %v337 = vsel %vm163, %v324, 0
  %339 = vmatprep.subr.mxu0 0.0
  %340 = vmatpush1.msra.mxu0 0.0
  %341 = vmatprep.subr.mxu0 0.0
  %342 = vmatpush1.msra.mxu0 0.0
  %343 = vmatprep.subr.mxu0 0.0
  %344 = vmatpush1.msra.mxu0 0.0
  %345 = vmatprep.subr.mxu0 0.0
  %346 = vmatpush1.msra.mxu0 0.0
  %347 = vmatprep.subr.mxu0 0.0
  %348 = vmatpush1.msra.mxu0 0.0
  %349 = vmatprep.subr.mxu0 0.0
  %350 = vmatpush1.msra.mxu0 0.0
  %351 = vmatprep.subr.mxu0 0.0
  %352 = vmatpush1.msra.mxu0 0.0
  %353 = vmatprep.subr.mxu0 0.0
  %354 = vmatpush1.msra.mxu0 0.0
  %355 = vmatprep.subr.mxu0 0.0
  %356 = vmatpush1.msra.mxu0 0.0
  %357 = vmatprep.subr.mxu0 0.0
  %358 = vmatpush1.msra.mxu0 0.0
  %359 = vmatprep.subr.mxu0 0.0
  %360 = vmatpush1.msra.mxu0 0.0
  %361 = vmatprep.subr.mxu0 0.0
  %362 = vmatpush1.msra.mxu0 0.0
  %363 = vmatprep.subr.mxu0 0.0
  %364 = vmatpush1.msra.mxu0 %v328
  %365 = vmatprep.subr.mxu0 0.0
  %366 = vmatpush1.msra.mxu0 %v327
  %367 = vmatprep.subr.mxu0 0.0
  %368 = vmatpush1.msra.mxu0 %v326
  %369 = vmatprep.subr.mxu0 0.0
  %370 = vmatpush1.msra.mxu0 %v325
  %371 = vmatprep.subr.mxu0 0.0
  %372 = vmatpush2.msra.mxu0 0.0
  %373 = vmatprep.subr.mxu0 0.0
  %374 = vmatpush2.msra.mxu0 0.0
  %375 = vmatprep.subr.mxu0 0.0
  %376 = vmatpush2.msra.mxu0 0.0
  %377 = vmatprep.subr.mxu0 0.0
  %378 = vmatpush2.msra.mxu0 0.0
  %379 = vmatprep.subr.mxu0 0.0
  %380 = vmatpush2.msra.mxu0 0.0
  %381 = vmatprep.subr.mxu0 0.0
  %382 = vmatpush2.msra.mxu0 0.0
  %383 = vmatprep.subr.mxu0 0.0
  %384 = vmatpush2.msra.mxu0 0.0
  %385 = vmatprep.subr.mxu0 0.0
  %386 = vmatpush2.msra.mxu0 0.0
  %387 = vmatprep.subr.mxu0 0.0
  %388 = vmatpush2.msra.mxu0 0.0
  %389 = vmatprep.subr.mxu0 0.0
  %390 = vmatpush2.msra.mxu0 0.0
  %391 = vmatprep.subr.mxu0 0.0
  %392 = vmatpush2.msra.mxu0 0.0
  %393 = vmatprep.subr.mxu0 0.0
  %394 = vmatpush2.msra.mxu0 0.0
  %395 = vmatprep.subr.mxu0 0.0
  %396 = vmatpush2.msra.mxu0 0.0
  %397 = vmatprep.subr.mxu0 0.0
  %398 = vmatpush2.msra.mxu0 0.0
  %399 = vmatprep.subr.mxu0 0.0
  %400 = vmatpush2.msra.mxu0 0.0
  %401 = vmatprep.subr.mxu0 0.0
  %402 = vmatpush2.msra.mxu0 0.0
  %403 = vmatprep.mubr.f32.mxu0 0.0
  %404 = vmatmul.mubr.f32.gmra.mxu0 %v337
  %v405 = vpop.f32.mrf.mxu0
  %v406 = vadd.f32 %v334, %v405
  %v407 = vpop.f32.mrf.mxu0
  %408 = vdwg.mxu0
  %vm409 = vcmask 1024
  %410 = vst.msk [vmem:[%s7] sm:$0x3] %vm409, %v406
  // Predicated region
  $region30: #{_lambda_.1} parent=0 // pred_check
    _
  $region31: #{_lambda_.1} parent=0 // pred_check_branch
    %412 = sbr.rel (0) target = $region33
  $region32: #{_lambda_.1} parent=0 // pred_region
    _
  $region33: #{_lambda_.1} parent=0 // pred_fallthru
    _
  // Predicated region
  $region34: #{_lambda_.1} parent=0 // pred_check
    _
  $region35: #{_lambda_.1} parent=0 // pred_check_branch
    %414 = sbr.rel (0) target = $region37
  $region36: #{_lambda_.1} parent=0 // pred_region
    _
  $region37: #{_lambda_.1} parent=0 // pred_fallthru
    _

</llo_original>
